<compile_context>
chip_gen: v5e
topology: v5e:2x2
jax: 0.10.0
libtpu: 0.0.40
codegen_flags: <defaults>
</compile_context>

<pallas_src>
import jax
import jax.numpy as jnp
from jax import lax
from jax.experimental import pallas as pl
from jax.experimental.pallas import tpu as pltpu

LANE = 128             # lane width (last dim of every tile)
MAX_TILE_ROWS = 4096   # 4096 * 128 * 4B = 2 MiB per input tile
NUM_CORE_SPLITS = 2    # leading "parallel" grid axis (2 TensorCores on v7x)


def _focal_loss_kernel(n_ref, pred_ref, gt_ref, loss_part_ref, npos_part_ref,
                       loss_acc, npos_acc):
    c = pl.program_id(0)                 # core-split index ("parallel")
    i = pl.program_id(1)                 # streaming tile index ("arbitrary")
    tiles_per_core = pl.num_programs(1)
    tile_rows = pred_ref.shape[0]
    tile_elems = tile_rows * LANE
    tile_idx = c * tiles_per_core + i    # UNCLAMPED global tile index
    tile_start = tile_idx * tile_elems

    @pl.when(i == 0)
    def _():
        loss_acc[...] = jnp.zeros_like(loss_acc)
        npos_acc[...] = jnp.zeros_like(npos_acc)

    n_valid = n_ref[0]
    # True for the ragged tail, for partially-OOB edge tiles and for the
    # duplicated (clamped-index) tiles of the core split.
    is_tail = tile_start + tile_elems > n_valid

    def accumulate(pred, gt):
        is_pos = gt == 1.0
        one_m_pred = 1.0 - pred
        one_m_gt = 1.0 - gt
        # Single EUP log per element: select the argument BEFORE the log.
        logv = jnp.log(jnp.where(is_pos, pred, one_m_pred))
        t2 = one_m_gt * one_m_gt
        w_neg = pred * pred * (t2 * t2)            # pred^2 * (1 - gt)^4
        w_pos = one_m_pred * one_m_pred            # (1 - pred)^2
        w = jnp.where(is_pos, w_pos, jnp.where(gt < 1.0, w_neg, 0.0))
        # Lane-dense partial reduction only; accumulators stay (1,128) VMEM.
        loss_acc[...] += jnp.sum(logv * w, axis=0, keepdims=True)
        npos_acc[...] += jnp.sum(is_pos.astype(jnp.float32), axis=0,
                                 keepdims=True)

    @pl.when(jnp.logical_not(is_tail))
    def _():
        # Fast path for interior tiles: no iota / compare / select mask math.
        accumulate(pred_ref[...].astype(jnp.float32),
                   gt_ref[...].astype(jnp.float32))

    @pl.when(is_tail)
    def _():
        # Mask by flat element index and sanitize BEFORE any log/pow so
        # padding / undefined edge-block garbage can never produce NaN/Inf.
        # TODO(synk): int32 flat index overflows for n > 2^31 elements; use a
        # row-granular compare + boundary-row lane mask if such sizes matter.
        row_ids = lax.broadcasted_iota(jnp.int32, (tile_rows, LANE), 0)
        lane_ids = lax.broadcasted_iota(jnp.int32, (tile_rows, LANE), 1)
        valid = (tile_start + row_ids * LANE + lane_ids) < n_valid
        pred = jnp.where(valid, pred_ref[...].astype(jnp.float32), 0.5)
        # gt = 2.0 for invalid elements -> neither pos (==1) nor neg (<1),
        # so both the loss weight and the num_pos contribution are zero.
        gt = jnp.where(valid, gt_ref[...].astype(jnp.float32), 2.0)
        accumulate(pred, gt)

    @pl.when(i == tiles_per_core - 1)
    def _():
        loss_part_ref[...] = loss_acc[...].reshape(1, 1, LANE)
        npos_part_ref[...] = npos_acc[...].reshape(1, 1, LANE)


def focal_loss(pred, gt):
    """Pallas equivalent of the PyTorch FocalLoss.forward(pred, gt)."""
    p = pred.reshape(-1)
    g = gt.reshape(-1)
    n = p.shape[0]

    rows = pl.cdiv(n, LANE)
    pad = rows * LANE - n
    if pad:
        # Only triggers when the flat size is not a multiple of 128; the
        # aligned case (typical heatmap shapes) is copy-free.  Pad values are
        # irrelevant: the kernel masks by n.
        p = jnp.pad(p, (0, pad))
        g = jnp.pad(g, (0, pad))
    p2 = p.reshape(rows, LANE)
    g2 = g.reshape(rows, LANE)

    # Tile selection: split the rows roughly in half for the leading
    # "parallel" axis (2 TCs on v7x; serial and near-free on v5e/v6e),
    # rounded up to a sublane multiple, capped for VMEM.
    if rows <= 8:
        tile_rows = rows                              # full-dim block, legal
    else:
        half = pl.cdiv(rows, NUM_CORE_SPLITS)
        tile_rows = min(pl.cdiv(half, 8) * 8, MAX_TILE_ROWS)
    num_tiles = pl.cdiv(rows, tile_rows)
    tiles_per_core = pl.cdiv(num_tiles, NUM_CORE_SPLITS)

    def data_map(c, i, n_ref):
        # Clamp so a core's overhang slot never issues an out-of-range block
        # DMA; the kernel masks the duplicated data to zero via its UNCLAMPED
        # flat-index range.
        t = c * tiles_per_core + i
        return (jnp.minimum(t, num_tiles - 1), 0)

    part_map = lambda c, i, n_ref: (c, 0, 0)
    n_arr = jnp.array([n], dtype=jnp.int32)

    loss_parts, npos_parts = pl.pallas_call(
        _focal_loss_kernel,
        out_shape=(
            jax.ShapeDtypeStruct((NUM_CORE_SPLITS, 1, LANE), jnp.float32),
            jax.ShapeDtypeStruct((NUM_CORE_SPLITS, 1, LANE), jnp.float32),
        ),
        grid_spec=pltpu.PrefetchScalarGridSpec(
            num_scalar_prefetch=1,
            grid=(NUM_CORE_SPLITS, tiles_per_core),
            in_specs=[
                pl.BlockSpec((tile_rows, LANE), data_map),
                pl.BlockSpec((tile_rows, LANE), data_map),
            ],
            out_specs=[
                pl.BlockSpec((1, 1, LANE), part_map),
                pl.BlockSpec((1, 1, LANE), part_map),
            ],
            scratch_shapes=[
                pltpu.VMEM((1, LANE), jnp.float32),   # loss accumulator
                pltpu.VMEM((1, LANE), jnp.float32),   # num_pos accumulator
            ],
        ),
        compiler_params=pltpu.CompilerParams(
            dimension_semantics=("parallel", "arbitrary"),
            vmem_limit_bytes=32 * 1024 * 1024,
        ),
    )(n_arr, p2, g2)

    loss_sum = jnp.sum(loss_parts)
    num_pos = jnp.sum(npos_parts)
    denom = jnp.where(num_pos == 0.0, 1.0, num_pos)
    # When num_pos == 0 the positive contribution is exactly zero, so
    # -loss_sum reproduces the reference's `-neg_loss` branch.
    return -loss_sum / denom


def _focal_loss_ref(pred, gt):
    """Plain-JAX reference mirroring the PyTorch module."""
    pos_inds = (gt == 1.0).astype(jnp.float32)
    neg_inds = (gt < 1.0).astype(jnp.float32)
    neg_weights = (1.0 - gt) ** 4
    pos_loss = jnp.log(pred) * (1.0 - pred) ** 2 * pos_inds
    neg_loss = jnp.log(1.0 - pred) * pred ** 2 * neg_weights * neg_inds
    num_pos = pos_inds.sum()
    pos_sum = pos_loss.sum()
    neg_sum = neg_loss.sum()
    denom = jnp.where(num_pos == 0.0, 1.0, num_pos)
    return jnp.where(num_pos == 0.0, -neg_sum, -(pos_sum + neg_sum) / denom)


if __name__ == "__main__":
    key = jax.random.PRNGKey(0)
    k1, k2, k3 = jax.random.split(key, 3)
    shape = (2, 4, 16, 16)  # small NCHW heatmap-style input

    # pred: sigmoid-like probabilities strictly inside (0, 1)
    pred = jax.random.uniform(k1, shape, jnp.float32,
                              minval=1e-4, maxval=1.0 - 1e-4)
    # gt: Gaussian-splat-like heatmap in [0, 1) with a few exact-1 peaks
    gt_soft = jax.random.uniform(k2, shape, jnp.float32,
                                 minval=0.0, maxval=0.999)
    peaks = jax.random.bernoulli(k3, 0.05, shape)
    gt = jnp.where(peaks, 1.0, gt_soft)

    loss = jax.block_until_ready(focal_loss(pred, gt))

    ref = _focal_loss_ref(pred, gt)
    assert jnp.allclose(loss, ref, rtol=1e-3, atol=1e-3), (loss, ref)

    print("KERNEL_OK")
</pallas_src>

<mosaic_0001>
module attributes {stable_mosaic.version = 11 : i64} {
  func.func @_focal_loss_kernel(%arg0: i32, %arg1: i32, %arg2: memref<1xi32, #tpu.memory_space<smem>>, %arg3: memref<8x128xf32, #tpu.memory_space<vmem>>, %arg4: memref<8x128xf32, #tpu.memory_space<vmem>>, %arg5: memref<1x1x128xf32, #tpu.memory_space<vmem>>, %arg6: memref<1x1x128xf32, #tpu.memory_space<vmem>>, %arg7: memref<1x128xf32, #tpu.memory_space<vmem>>, %arg8: memref<1x128xf32, #tpu.memory_space<vmem>>) attributes {dimension_semantics = [#tpu.dimension_semantics<parallel>, #tpu.dimension_semantics<arbitrary>], iteration_bounds = array<i64: 2, 1>, scalar_prefetch = 1 : i64, scratch_operands = 2 : i64, tpu.core_type = #tpu.core_type<tc>, window_params = [{transform_indices = @transform_0, window_bounds = array<i64: 8, 128>}, {transform_indices = @transform_1, window_bounds = array<i64: 8, 128>}, {transform_indices = @transform_2, window_bounds = array<i64: 1, 1, 128>}, {transform_indices = @transform_3, window_bounds = array<i64: 1, 1, 128>}]} {
    %c1_i32 = arith.constant 1 : i32
    %0 = arith.muli %arg0, %c1_i32 : i32
    %1 = arith.addi %0, %arg1 : i32
    %c1024_i32 = arith.constant 1024 : i32
    %2 = arith.muli %1, %c1024_i32 : i32
    %c0_i32 = arith.constant 0 : i32
    %3 = arith.cmpi eq, %arg1, %c0_i32 : i32
    %4 = arith.extui %3 : i1 to i32
    %c0_i32_0 = arith.constant 0 : i32
    %5 = arith.cmpi ne, %4, %c0_i32_0 : i32
    scf.if %5 {
      %cst = arith.constant 0.000000e+00 : f32
      %17 = vector.broadcast %cst : f32 to vector<1x128xf32>
      %c0_6 = arith.constant 0 : index
      %c0_7 = arith.constant 0 : index
      %18 = vector.load %arg7[%c0_6, %c0_7] : memref<1x128xf32, #tpu.memory_space<vmem>>, vector<1x128xf32>
      tpu.vector_store %arg7[%c0_6, %c0_7], %17 {strides = array<i32>} : memref<1x128xf32, #tpu.memory_space<vmem>>, vector<1x128xf32>,
      %cst_8 = arith.constant 0.000000e+00 : f32
      %19 = vector.broadcast %cst_8 : f32 to vector<1x128xf32>
      %c0_9 = arith.constant 0 : index
      %c0_10 = arith.constant 0 : index
      %20 = vector.load %arg8[%c0_9, %c0_10] : memref<1x128xf32, #tpu.memory_space<vmem>>, vector<1x128xf32>
      tpu.vector_store %arg8[%c0_9, %c0_10], %19 {strides = array<i32>} : memref<1x128xf32, #tpu.memory_space<vmem>>, vector<1x128xf32>,
    } else {
    }
    %c0 = arith.constant 0 : index
    %6 = memref.load %arg2[%c0] : memref<1xi32, #tpu.memory_space<smem>>
    %c1024_i32_1 = arith.constant 1024 : i32
    %7 = arith.addi %2, %c1024_i32_1 : i32
    %8 = arith.cmpi sgt, %7, %6 : i32
    %true = arith.constant true
    %9 = arith.xori %8, %true : i1
    %10 = arith.extui %9 : i1 to i32
    %c0_i32_2 = arith.constant 0 : i32
    %11 = arith.cmpi ne, %10, %c0_i32_2 : i32
    scf.if %11 {
      %c0_6 = arith.constant 0 : index
      %c0_7 = arith.constant 0 : index
      %17 = vector.load %arg3[%c0_6, %c0_7] : memref<8x128xf32, #tpu.memory_space<vmem>>, vector<8x128xf32>
      %c0_8 = arith.constant 0 : index
      %c0_9 = arith.constant 0 : index
      %18 = vector.load %arg4[%c0_8, %c0_9] : memref<8x128xf32, #tpu.memory_space<vmem>>, vector<8x128xf32>
      %cst = arith.constant 1.000000e+00 : f32
      %19 = vector.broadcast %cst : f32 to vector<8x128xf32>
      %20 = arith.cmpf oeq, %18, %19 : vector<8x128xf32>
      %cst_10 = arith.constant 1.000000e+00 : f32
      %21 = vector.broadcast %cst_10 : f32 to vector<8x128xf32>
      %22 = arith.subf %21, %17 : vector<8x128xf32>
      %cst_11 = arith.constant 1.000000e+00 : f32
      %23 = vector.broadcast %cst_11 : f32 to vector<8x128xf32>
      %24 = arith.subf %23, %18 : vector<8x128xf32>
      %25 = arith.select %20, %17, %22 : vector<8x128xi1>, vector<8x128xf32>
      %26 = math.log %25 : vector<8x128xf32>
      %27 = arith.mulf %24, %24 : vector<8x128xf32>
      %28 = arith.mulf %17, %17 : vector<8x128xf32>
      %29 = arith.mulf %27, %27 : vector<8x128xf32>
      %30 = arith.mulf %28, %29 : vector<8x128xf32>
      %31 = arith.mulf %22, %22 : vector<8x128xf32>
      %cst_12 = arith.constant 1.000000e+00 : f32
      %32 = vector.broadcast %cst_12 : f32 to vector<8x128xf32>
      %33 = arith.cmpf olt, %18, %32 : vector<8x128xf32>
      %cst_13 = arith.constant 0.000000e+00 : f32
      %34 = vector.broadcast %cst_13 : f32 to vector<8x128xf32>
      %35 = arith.select %33, %30, %34 : vector<8x128xi1>, vector<8x128xf32>
      %36 = arith.select %20, %31, %35 : vector<8x128xi1>, vector<8x128xf32>
      %c0_14 = arith.constant 0 : index
      %c0_15 = arith.constant 0 : index
      %37 = vector.load %arg7[%c0_14, %c0_15] : memref<1x128xf32, #tpu.memory_space<vmem>>, vector<1x128xf32>
      %38 = arith.mulf %26, %36 : vector<8x128xf32>
      %cst_16 = arith.constant dense<0.000000e+00> : vector<128xf32>
      %39 = vector.multi_reduction <add>, %38, %cst_16 [0] : vector<8x128xf32> to vector<128xf32>
      %40 = vector.shape_cast %39 : vector<128xf32> to vector<1x128xf32>
      %41 = arith.addf %37, %40 : vector<1x128xf32>
      %c0_17 = arith.constant 0 : index
      %c0_18 = arith.constant 0 : index
      %42 = vector.load %arg7[%c0_17, %c0_18] : memref<1x128xf32, #tpu.memory_space<vmem>>, vector<1x128xf32>
      tpu.vector_store %arg7[%c0_17, %c0_18], %41 {strides = array<i32>} : memref<1x128xf32, #tpu.memory_space<vmem>>, vector<1x128xf32>,
      %c0_19 = arith.constant 0 : index
      %c0_20 = arith.constant 0 : index
      %43 = vector.load %arg8[%c0_19, %c0_20] : memref<1x128xf32, #tpu.memory_space<vmem>>, vector<1x128xf32>
      %44 = arith.extui %20 : vector<8x128xi1> to vector<8x128xi32>
      %45 = arith.sitofp %44 : vector<8x128xi32> to vector<8x128xf32>
      %cst_21 = arith.constant dense<0.000000e+00> : vector<128xf32>
      %46 = vector.multi_reduction <add>, %45, %cst_21 [0] : vector<8x128xf32> to vector<128xf32>
      %47 = vector.shape_cast %46 : vector<128xf32> to vector<1x128xf32>
      %48 = arith.addf %43, %47 : vector<1x128xf32>
      %c0_22 = arith.constant 0 : index
      %c0_23 = arith.constant 0 : index
      %49 = vector.load %arg8[%c0_22, %c0_23] : memref<1x128xf32, #tpu.memory_space<vmem>>, vector<1x128xf32>
      tpu.vector_store %arg8[%c0_22, %c0_23], %48 {strides = array<i32>} : memref<1x128xf32, #tpu.memory_space<vmem>>, vector<1x128xf32>,
    } else {
    }
    %12 = arith.extui %8 : i1 to i32
    %c0_i32_3 = arith.constant 0 : i32
    %13 = arith.cmpi ne, %12, %c0_i32_3 : i32
    scf.if %13 {
      %17 = tpu.iota {dimensions = array<i32: 0>} : vector<8x128xi32>
      %18 = tpu.iota {dimensions = array<i32: 1>} : vector<8x128xi32>
      %c128_i32 = arith.constant 128 : i32
      %19 = vector.broadcast %c128_i32 : i32 to vector<8x128xi32>
      %20 = arith.muli %17, %19 : vector<8x128xi32>
      %21 = vector.broadcast %2 : i32 to vector<8x128xi32>
      %22 = arith.addi %21, %20 : vector<8x128xi32>
      %23 = arith.addi %22, %18 : vector<8x128xi32>
      %24 = vector.broadcast %6 : i32 to vector<8x128xi32>
      %25 = arith.cmpi slt, %23, %24 : vector<8x128xi32>
      %c0_6 = arith.constant 0 : index
      %c0_7 = arith.constant 0 : index
      %26 = vector.load %arg3[%c0_6, %c0_7] : memref<8x128xf32, #tpu.memory_space<vmem>>, vector<8x128xf32>
      %cst = arith.constant 5.000000e-01 : f32
      %27 = vector.broadcast %cst : f32 to vector<8x128xf32>
      %28 = arith.select %25, %26, %27 : vector<8x128xi1>, vector<8x128xf32>
      %c0_8 = arith.constant 0 : index
      %c0_9 = arith.constant 0 : index
      %29 = vector.load %arg4[%c0_8, %c0_9] : memref<8x128xf32, #tpu.memory_space<vmem>>, vector<8x128xf32>
      %cst_10 = arith.constant 2.000000e+00 : f32
      %30 = vector.broadcast %cst_10 : f32 to vector<8x128xf32>
      %31 = arith.select %25, %29, %30 : vector<8x128xi1>, vector<8x128xf32>
      %cst_11 = arith.constant 1.000000e+00 : f32
      %32 = vector.broadcast %cst_11 : f32 to vector<8x128xf32>
      %33 = arith.cmpf oeq, %31, %32 : vector<8x128xf32>
      %cst_12 = arith.constant 1.000000e+00 : f32
      %34 = vector.broadcast %cst_12 : f32 to vector<8x128xf32>
      %35 = arith.subf %34, %28 : vector<8x128xf32>
      %cst_13 = arith.constant 1.000000e+00 : f32
      %36 = vector.broadcast %cst_13 : f32 to vector<8x128xf32>
      %37 = arith.subf %36, %31 : vector<8x128xf32>
      %38 = arith.select %33, %28, %35 : vector<8x128xi1>, vector<8x128xf32>
      %39 = math.log %38 : vector<8x128xf32>
      %40 = arith.mulf %37, %37 : vector<8x128xf32>
      %41 = arith.mulf %28, %28 : vector<8x128xf32>
      %42 = arith.mulf %40, %40 : vector<8x128xf32>
      %43 = arith.mulf %41, %42 : vector<8x128xf32>
      %44 = arith.mulf %35, %35 : vector<8x128xf32>
      %cst_14 = arith.constant 1.000000e+00 : f32
      %45 = vector.broadcast %cst_14 : f32 to vector<8x128xf32>
      %46 = arith.cmpf olt, %31, %45 : vector<8x128xf32>
      %cst_15 = arith.constant 0.000000e+00 : f32
      %47 = vector.broadcast %cst_15 : f32 to vector<8x128xf32>
      %48 = arith.select %46, %43, %47 : vector<8x128xi1>, vector<8x128xf32>
      %49 = arith.select %33, %44, %48 : vector<8x128xi1>, vector<8x128xf32>
      %c0_16 = arith.constant 0 : index
      %c0_17 = arith.constant 0 : index
      %50 = vector.load %arg7[%c0_16, %c0_17] : memref<1x128xf32, #tpu.memory_space<vmem>>, vector<1x128xf32>
      %51 = arith.mulf %39, %49 : vector<8x128xf32>
      %cst_18 = arith.constant dense<0.000000e+00> : vector<128xf32>
      %52 = vector.multi_reduction <add>, %51, %cst_18 [0] : vector<8x128xf32> to vector<128xf32>
      %53 = vector.shape_cast %52 : vector<128xf32> to vector<1x128xf32>
      %54 = arith.addf %50, %53 : vector<1x128xf32>
      %c0_19 = arith.constant 0 : index
      %c0_20 = arith.constant 0 : index
      %55 = vector.load %arg7[%c0_19, %c0_20] : memref<1x128xf32, #tpu.memory_space<vmem>>, vector<1x128xf32>
      tpu.vector_store %arg7[%c0_19, %c0_20], %54 {strides = array<i32>} : memref<1x128xf32, #tpu.memory_space<vmem>>, vector<1x128xf32>,
      %c0_21 = arith.constant 0 : index
      %c0_22 = arith.constant 0 : index
      %56 = vector.load %arg8[%c0_21, %c0_22] : memref<1x128xf32, #tpu.memory_space<vmem>>, vector<1x128xf32>
      %57 = arith.extui %33 : vector<8x128xi1> to vector<8x128xi32>
      %58 = arith.sitofp %57 : vector<8x128xi32> to vector<8x128xf32>
      %cst_23 = arith.constant dense<0.000000e+00> : vector<128xf32>
      %59 = vector.multi_reduction <add>, %58, %cst_23 [0] : vector<8x128xf32> to vector<128xf32>
      %60 = vector.shape_cast %59 : vector<128xf32> to vector<1x128xf32>
      %61 = arith.addf %56, %60 : vector<1x128xf32>
      %c0_24 = arith.constant 0 : index
      %c0_25 = arith.constant 0 : index
      %62 = vector.load %arg8[%c0_24, %c0_25] : memref<1x128xf32, #tpu.memory_space<vmem>>, vector<1x128xf32>
      tpu.vector_store %arg8[%c0_24, %c0_25], %61 {strides = array<i32>} : memref<1x128xf32, #tpu.memory_space<vmem>>, vector<1x128xf32>,
    } else {
    }
    %c0_i32_4 = arith.constant 0 : i32
    %14 = arith.cmpi eq, %arg1, %c0_i32_4 : i32
    %15 = arith.extui %14 : i1 to i32
    %c0_i32_5 = arith.constant 0 : i32
    %16 = arith.cmpi ne, %15, %c0_i32_5 : i32
    scf.if %16 {
      %c0_6 = arith.constant 0 : index
      %c0_7 = arith.constant 0 : index
      %17 = vector.load %arg7[%c0_6, %c0_7] : memref<1x128xf32, #tpu.memory_space<vmem>>, vector<1x128xf32>
      %18 = vector.shape_cast %17 : vector<1x128xf32> to vector<1x1x128xf32>
      %c0_8 = arith.constant 0 : index
      %c0_9 = arith.constant 0 : index
      %c0_10 = arith.constant 0 : index
      %19 = vector.load %arg5[%c0_8, %c0_9, %c0_10] : memref<1x1x128xf32, #tpu.memory_space<vmem>>, vector<1x1x128xf32>
      tpu.vector_store %arg5[%c0_8, %c0_9, %c0_10], %18 {strides = array<i32>} : memref<1x1x128xf32, #tpu.memory_space<vmem>>, vector<1x1x128xf32>,
      %c0_11 = arith.constant 0 : index
      %c0_12 = arith.constant 0 : index
      %20 = vector.load %arg8[%c0_11, %c0_12] : memref<1x128xf32, #tpu.memory_space<vmem>>, vector<1x128xf32>
      %21 = vector.shape_cast %20 : vector<1x128xf32> to vector<1x1x128xf32>
      %c0_13 = arith.constant 0 : index
      %c0_14 = arith.constant 0 : index
      %c0_15 = arith.constant 0 : index
      %22 = vector.load %arg6[%c0_13, %c0_14, %c0_15] : memref<1x1x128xf32, #tpu.memory_space<vmem>>, vector<1x1x128xf32>
      tpu.vector_store %arg6[%c0_13, %c0_14, %c0_15], %21 {strides = array<i32>} : memref<1x1x128xf32, #tpu.memory_space<vmem>>, vector<1x1x128xf32>,
    } else {
    }
    return
  }
  func.func @transform_0(%arg0: i32, %arg1: i32, %arg2: memref<1xi32, #tpu.memory_space<smem>>) -> (i32, i32) {
    %c1_i32 = arith.constant 1 : i32
    %0 = arith.muli %arg0, %c1_i32 : i32
    %1 = arith.addi %0, %arg1 : i32
    %c1_i32_0 = arith.constant 1 : i32
    %2 = arith.minsi %1, %c1_i32_0 : i32
    %c0_i32 = arith.constant 0 : i32
    %c0_i32_1 = arith.constant 0 : i32
    return %2, %c0_i32 : i32, i32
  }
  func.func @transform_1(%arg0: i32, %arg1: i32, %arg2: memref<1xi32, #tpu.memory_space<smem>>) -> (i32, i32) {
    %c1_i32 = arith.constant 1 : i32
    %0 = arith.muli %arg0, %c1_i32 : i32
    %1 = arith.addi %0, %arg1 : i32
    %c1_i32_0 = arith.constant 1 : i32
    %2 = arith.minsi %1, %c1_i32_0 : i32
    %c0_i32 = arith.constant 0 : i32
    %c0_i32_1 = arith.constant 0 : i32
    return %2, %c0_i32 : i32, i32
  }
  func.func @transform_2(%arg0: i32, %arg1: i32, %arg2: memref<1xi32, #tpu.memory_space<smem>>) -> (i32, i32, i32) {
    %c0_i32 = arith.constant 0 : i32
    %c0_i32_0 = arith.constant 0 : i32
    %c0_i32_1 = arith.constant 0 : i32
    return %arg0, %c0_i32, %c0_i32_0 : i32, i32, i32
  }
  func.func @transform_3(%arg0: i32, %arg1: i32, %arg2: memref<1xi32, #tpu.memory_space<smem>>) -> (i32, i32, i32) {
    %c0_i32 = arith.constant 0 : i32
    %c0_i32_0 = arith.constant 0 : i32
    %c0_i32_1 = arith.constant 0 : i32
    return %arg0, %c0_i32, %c0_i32_0 : i32, i32, i32
  }
}

</mosaic_0001>

<llo_original>
// kernel: tpu_custom_call.1
$region0: #{tpu_custom_call.1}
  #allocation0 [shape = 'u32[]', space=smem, size = 0x4, offset = 0x4, fixed_abs, tag = 'smem constant byte address 0x4 - core index']
  #allocation1 [shape = 'u32[72,128]{1,0:T(1,128)}', space=vmem, size = 0x9000, scoped, tag = 'internal scratch']
  #allocation2 [shape = 'f32[1,128]{1,0:T(1,128)}', space=vmem, size = 0x200, scoped, tag = 'scratch operand']
  #allocation3 [shape = 'f32[1,128]{1,0:T(1,128)}', space=vmem, size = 0x200, scoped, tag = 'scratch operand']
  #allocation4 [shape = 's32[1]{0}', space=sflag, size = 0x4, scoped, tag = 'scoped memory for tpu_custom_call.1']
  #allocation5 [shape = 's32[1]{0:T(128)S(6)}', space=smem, size = 0x200, scoped, tag = 'prefetched SMEM operand 0']
  %s0 = inlined_call_operand.<no memory space> [shape: s32[1], index: 0, kind: input, shape index: {}]
  %s1 = inlined_call_operand.hbm [shape: f32[16,128], index: 1, kind: input, shape index: {}]
  %s2 = inlined_call_operand.hbm [shape: f32[16,128], index: 2, kind: input, shape index: {}]
  %s3 = inlined_call_operand.hbm [shape: f32[2,1,128], index: 3, kind: output, shape index: {0}]
  %s4 = inlined_call_operand.hbm [shape: f32[2,1,128], index: 4, kind: output, shape index: {1}]
  %5 = xla_tuple %s3, %s4
  %s6 = sld [smem:[#allocation0]]
  $region73: #{tpu_custom_call.1} parent=0
    _
  %s8 = ssub.s32 1, %s6
  %s9 = scalar_select 0, %s8, %s6
  %10 = sst [smem:[#allocation5]] %s0
  $region1: #{tpu_custom_call.1} parent=0
    #allocation6 [shape = 'u8[8192]{0}', space=vmem, size = 0x2000, scoped, tag = 'input window, operand 1']
    #allocation7 [shape = 's32[2]{0}', space=sflag, size = 0x8, scoped, tag = 'scoped memory for tpu_custom_call.1']
    #allocation8 [shape = 's32[2]{0}', space=sflag, size = 0x8, scoped, tag = 'scoped memory for tpu_custom_call.1']
    #allocation9 [shape = 'u8[8192]{0}', space=vmem, size = 0x2000, scoped, tag = 'input window, operand 2']
    #allocation10 [shape = 's32[2]{0}', space=sflag, size = 0x8, scoped, tag = 'scoped memory for tpu_custom_call.1']
    #allocation11 [shape = 'u8[1024]{0}', space=vmem, size = 0x400, scoped, tag = 'output window, operand 0']
    #allocation12 [shape = 'u8[1024]{0}', space=vmem, size = 0x400, scoped, tag = 'output window, operand 1']
    #allocation13 [shape = 's32[2]{0}', space=sflag, size = 0x8, scoped, tag = 'scoped memory for tpu_custom_call.1']
    %11 = vsyncpa [#allocation7], 0
    %s12 = scalar_lea.sflag [#allocation7], 1
    %13 = vsyncpa %s12, 0
    %14 = vsyncpa [#allocation10], 0
    %s15 = scalar_lea.sflag [#allocation10], 1
    %16 = vsyncpa %s15, 0
    %17 = vsyncpa [#allocation8], 0
    %s18 = scalar_lea.sflag [#allocation8], 1
    %19 = vsyncpa %s18, 0
    %20 = vsyncpa [#allocation13], 0
    %s21 = scalar_lea.sflag [#allocation13], 1
    %22 = vsyncpa %s21, 0
    loop: start=0, step=1, limit=4
    $region2: #{tpu_custom_call.1} parent=1 // loop_pre_header
      _
    $region3: #{tpu_custom_call.1} parent=1 // loop_header
      %s24 = sphi 0, %s28
      %p25 = scmp.ge.s32.totalorder %s24, 4
      %s31 = sphi 0, %s43
      %s32 = sphi 0, %s39
      %s33 = sphi 0, %s31
      %s34 = sphi 0, %s32
      %s35 = sphi 0, %s33
      %s36 = sphi 0, %s34
      %s52 = sphi 0, %s54
      %s55 = sphi 0, %s52
      %s56 = sphi 0, %s55
      %s72 = sphi 0, %s56
      %s84 = sphi 0, %s86
      %s87 = sphi 0, %s84
      %s88 = sphi 0, %s87
      %s104 = sphi 0, %s88
      %s110 = sphi 0, %s112
      %s113 = sphi 0, %s110
      %s114 = sphi 0, %s113
      %s130 = sphi 0, %s114
      %s136 = sphi 0, %s138
      %s139 = sphi 0, %s136
      %s140 = sphi 0, %s139
      %s156 = sphi 0, %s140
    $region4: #{tpu_custom_call.1} parent=1 // loop_header_branch
      %27 = sbr.rel (%p25) target = $region8
    $region5: #{tpu_custom_call.1} parent=1 // loop_body
      %s29 = ssub.s32 %s24, 1
      %s30 = ssub.s32 %s24, 2
      %s37 = sadd.s32 1, %s32
      %p38 = scmp.ge.s32.totalorder %s37, 1
      %s39 = scalar_select %p38, 0, %s37
      %s40 = sadd.s32 1, %s31
      %s41 = scalar_select %p38, %s40, %s31
      %p42 = scmp.ge.s32.totalorder %s41, 2
      %s43 = scalar_select %p42, 0, %s41
      %s44 = sadd.s32 %s31, %s32
      %p45 = scmp.lt.s32.totalorder %s44, 1
      %s46 = scalar_select %p45, %s44, 1
      %s47 = sadd.s32 %s43, %s39
      %p48 = scmp.lt.s32.totalorder %s47, 1
      %s49 = scalar_select %p48, %s47, 1
      %s50 = ssub.s32 %s46, %s49
      %p51 = scmp.eq.s32.totalorder %s50, 0
      %s53 = sadd.s32 %s52, 1
      %s54 = scalar_select %p51, %s52, %s53
      %p57 = pneg %p51
      %p58 = scmp.eq.s32.totalorder %s24, 1
      %p59 = por %p57, %p58
      %p60 = scmp.ne.s32.totalorder %s52, %s55
      %p61 = scmp.eq.s32.totalorder %s24, 0
      %p62 = por %p60, %p61
      %p63 = scmp.ne.s32.totalorder %s52, %s55
      %p64 = scmp.eq.s32.totalorder %s29, 1
      %p65 = por %p63, %p64
      %p66 = scmp.ne.s32.totalorder %s55, %s56
      %p67 = scmp.eq.s32.totalorder %s29, 0
      %p68 = por %p66, %p67
      %p69 = scmp.ne.s32.totalorder %s55, %s56
      %p70 = scmp.eq.s32.totalorder %s30, 1
      %p71 = por %p69, %p70
      %p73 = scmp.ne.s32.totalorder %s56, %s72
      %p74 = scmp.eq.s32.totalorder %s30, 0
      %p75 = por %p73, %p74
      %s76 = sadd.s32 %s31, %s32
      %p77 = scmp.lt.s32.totalorder %s76, 1
      %s78 = scalar_select %p77, %s76, 1
      %s79 = sadd.s32 %s43, %s39
      %p80 = scmp.lt.s32.totalorder %s79, 1
      %s81 = scalar_select %p80, %s79, 1
      %s82 = ssub.s32 %s78, %s81
      %p83 = scmp.eq.s32.totalorder %s82, 0
      %s85 = sadd.s32 %s84, 1
      %s86 = scalar_select %p83, %s84, %s85
      %p89 = pneg %p83
      %p90 = scmp.eq.s32.totalorder %s24, 1
      %p91 = por %p89, %p90
      %p92 = scmp.ne.s32.totalorder %s84, %s87
      %p93 = scmp.eq.s32.totalorder %s24, 0
      %p94 = por %p92, %p93
      %p95 = scmp.ne.s32.totalorder %s84, %s87
      %p96 = scmp.eq.s32.totalorder %s29, 1
      %p97 = por %p95, %p96
      %p98 = scmp.ne.s32.totalorder %s87, %s88
      %p99 = scmp.eq.s32.totalorder %s29, 0
      %p100 = por %p98, %p99
      %p101 = scmp.ne.s32.totalorder %s87, %s88
      %p102 = scmp.eq.s32.totalorder %s30, 1
      %p103 = por %p101, %p102
      %p105 = scmp.ne.s32.totalorder %s88, %s104
      %p106 = scmp.eq.s32.totalorder %s30, 0
      %p107 = por %p105, %p106
      %s108 = ssub.s32 %s31, %s43
      %p109 = scmp.eq.s32.totalorder %s108, 0
      %s111 = sadd.s32 %s110, 1
      %s112 = scalar_select %p109, %s110, %s111
      %p115 = pneg %p109
      %p116 = scmp.eq.s32.totalorder %s24, 1
      %p117 = por %p115, %p116
      %p118 = scmp.ne.s32.totalorder %s110, %s113
      %p119 = scmp.eq.s32.totalorder %s24, 0
      %p120 = por %p118, %p119
      %p121 = scmp.ne.s32.totalorder %s110, %s113
      %p122 = scmp.eq.s32.totalorder %s29, 1
      %p123 = por %p121, %p122
      %p124 = scmp.ne.s32.totalorder %s113, %s114
      %p125 = scmp.eq.s32.totalorder %s29, 0
      %p126 = por %p124, %p125
      %p127 = scmp.ne.s32.totalorder %s113, %s114
      %p128 = scmp.eq.s32.totalorder %s30, 1
      %p129 = por %p127, %p128
      %p131 = scmp.ne.s32.totalorder %s114, %s130
      %p132 = scmp.eq.s32.totalorder %s30, 0
      %p133 = por %p131, %p132
      %s134 = ssub.s32 %s31, %s43
      %p135 = scmp.eq.s32.totalorder %s134, 0
      %s137 = sadd.s32 %s136, 1
      %s138 = scalar_select %p135, %s136, %s137
      %p141 = pneg %p135
      %p142 = scmp.eq.s32.totalorder %s24, 1
      %p143 = por %p141, %p142
      %p144 = scmp.ne.s32.totalorder %s136, %s139
      %p145 = scmp.eq.s32.totalorder %s24, 0
      %p146 = por %p144, %p145
      %p147 = scmp.ne.s32.totalorder %s136, %s139
      %p148 = scmp.eq.s32.totalorder %s29, 1
      %p149 = por %p147, %p148
      %p150 = scmp.ne.s32.totalorder %s139, %s140
      %p151 = scmp.eq.s32.totalorder %s29, 0
      %p152 = por %p150, %p151
      %p153 = scmp.ne.s32.totalorder %s139, %s140
      %p154 = scmp.eq.s32.totalorder %s30, 1
      %p155 = por %p153, %p154
      %p157 = scmp.ne.s32.totalorder %s140, %s156
      %p158 = scmp.eq.s32.totalorder %s30, 0
      %p159 = por %p157, %p158
      %p160 = scmp.le.s32.totalorder 1, %s24
      %p161 = scmp.lt.s32.totalorder %s24, 3
      %p162 = pnand %p160, %p161
      %p163 = pneg %p162
      // Predicated region
      $region9: #{tpu_custom_call.1} parent=5 // pred_check
        _
      $region10: #{tpu_custom_call.1} parent=5 // pred_check_branch
        %165 = sbr.rel (%p162) target = $region12
      $region11: #{tpu_custom_call.1} parent=5 // pred_region
        %s166 = ssub.s32 %s24, 1
      $region12: #{tpu_custom_call.1} parent=5 // pred_fallthru
        _
      %p167 = scmp.lt.s32.totalorder %s24, 2
      // Predicated region
      $region13: #{tpu_custom_call.1} parent=5 // pred_check
        %p168 = pneg %p167
      $region14: #{tpu_custom_call.1} parent=5 // pred_check_branch
        %170 = sbr.rel (%p168) target = $region16
      $region15: #{tpu_custom_call.1} parent=5 // pred_region
        // Predicated region
        $region17: #{tpu_custom_call.1} parent=15 // pred_check
          %p171 = pneg %p62
        $region18: #{tpu_custom_call.1} parent=15 // pred_check_branch
          %173 = sbr.rel (%p171) target = $region20
        $region19: #{tpu_custom_call.1} parent=15 // pred_region
          %s174 = sand.u32 %s52, 1
          %s175 = scalar_lea.sflag [#allocation7], %s174
          %s176 = sand.u32 %s52, 1
          %s177 = smul.addr %s176, 8
          %s178 = scalar_lea.vmem [#allocation6], %s177
          %s179 = sadd.s32 %s31, %s32
          %p180 = scmp.lt.s32.totalorder %s179, 1
          %s181 = scalar_select %p180, %s179, 1
          %183 = vsyncadd %s175, 0
          %s184 = smul.addr %s181, 8
          %s185 = scalar_lea.hbm %s1, %s184
          %s187 = sshll.u32 %s185, 4
          %s188 = int_to_ptr.hbm [resolvable:$true] %s187
          %s189 = sshll.u32 %s178, 4
          %s190 = int_to_ptr.vmem [resolvable:$true] %s189
          %192 = dma.hbm_to_vmem [thread:$0]  %s188, 128, %s190, %s175
        $region20: #{tpu_custom_call.1} parent=15 // pred_fallthru
          _
        // Predicated region
        $region21: #{tpu_custom_call.1} parent=15 // pred_check
          %p193 = pneg %p94
        $region22: #{tpu_custom_call.1} parent=15 // pred_check_branch
          %195 = sbr.rel (%p193) target = $region24
        $region23: #{tpu_custom_call.1} parent=15 // pred_region
          %s196 = sand.u32 %s84, 1
          %s197 = scalar_lea.sflag [#allocation10], %s196
          %s198 = sand.u32 %s84, 1
          %s199 = smul.addr %s198, 8
          %s200 = scalar_lea.vmem [#allocation9], %s199
          %s201 = sadd.s32 %s31, %s32
          %p202 = scmp.lt.s32.totalorder %s201, 1
          %s203 = scalar_select %p202, %s201, 1
          %205 = vsyncadd %s197, 0
          %s206 = smul.addr %s203, 8
          %s207 = scalar_lea.hbm %s2, %s206
          %s209 = sshll.u32 %s207, 4
          %s210 = int_to_ptr.hbm [resolvable:$true] %s209
          %s211 = sshll.u32 %s200, 4
          %s212 = int_to_ptr.vmem [resolvable:$true] %s211
          %214 = dma.hbm_to_vmem [thread:$0]  %s210, 128, %s212, %s197
        $region24: #{tpu_custom_call.1} parent=15 // pred_fallthru
          _
      $region16: #{tpu_custom_call.1} parent=5 // pred_fallthru
        _
      %p215 = scmp.le.s32.totalorder 1, %s24
      %p216 = scmp.lt.s32.totalorder %s24, 3
      %p217 = pnand %p215, %p216
      %p218 = pneg %p217
      // Predicated region
      $region25: #{tpu_custom_call.1} parent=5 // pred_check
        _
      $region26: #{tpu_custom_call.1} parent=5 // pred_check_branch
        %220 = sbr.rel (%p217) target = $region28
      $region27: #{tpu_custom_call.1} parent=5 // pred_region
        %s221 = ssub.s32 %s24, 1
        %s222 = sand.u32 %s55, 1
        %s223 = scalar_lea.sflag [#allocation7], %s222
        %s224 = sand.u32 %s55, 1
        %s225 = smul.addr %s224, 8
        %s226 = scalar_lea.vmem [#allocation6], %s225
        // Predicated region
        $region29: #{tpu_custom_call.1} parent=27 // pred_check
          %p227 = pneg %p68
        $region30: #{tpu_custom_call.1} parent=27 // pred_check_branch
          %229 = sbr.rel (%p227) target = $region32
        $region31: #{tpu_custom_call.1} parent=27 // pred_region
          %231 = dma.done %s223, 128
        $region32: #{tpu_custom_call.1} parent=27 // pred_fallthru
          _
        %s232 = sand.u32 %s87, 1
        %s233 = scalar_lea.sflag [#allocation10], %s232
        %s234 = sand.u32 %s87, 1
        %s235 = smul.addr %s234, 8
        %s236 = scalar_lea.vmem [#allocation9], %s235
        // Predicated region
        $region33: #{tpu_custom_call.1} parent=27 // pred_check
          %p237 = pneg %p100
        $region34: #{tpu_custom_call.1} parent=27 // pred_check_branch
          %239 = sbr.rel (%p237) target = $region36
        $region35: #{tpu_custom_call.1} parent=27 // pred_region
          %241 = dma.done %s233, 128
        $region36: #{tpu_custom_call.1} parent=27 // pred_fallthru
          _
        %s242 = sand.u32 %s55, 1
        %s243 = scalar_lea.sflag [#allocation7], %s242
        %s244 = sand.u32 %s55, 1
        %s245 = smul.addr %s244, 8
        %s246 = scalar_lea.vmem [#allocation6], %s245
        %p247 = pneg %p68
        %p248 = pneg %p65
        %s249 = sand.u32 %s87, 1
        %s250 = scalar_lea.sflag [#allocation10], %s249
        %s251 = sand.u32 %s87, 1
        %s252 = smul.addr %s251, 8
        %s253 = scalar_lea.vmem [#allocation9], %s252
        %p254 = pneg %p100
        %p255 = pneg %p97
        %p256 = pneg %p126
        %p257 = pneg %p123
        %s258 = sand.u32 %s113, 1
        %s259 = scalar_lea.sflag [#allocation8], %s258
        %s260 = sand.u32 %s113, 1
        %s261 = scalar_lea.vmem [#allocation11], %s260
        %p262 = pneg %p152
        %p263 = pneg %p149
        %s264 = sand.u32 %s139, 1
        %s265 = scalar_lea.sflag [#allocation13], %s264
        %s266 = sand.u32 %s139, 1
        %s267 = scalar_lea.vmem [#allocation12], %s266
        %s268 = sadd.s32 %s33, %s34
        %p269 = scmp.lt.s32.totalorder %s268, 1
        %s270 = scalar_select %p269, %s268, 1
        %s271 = sadd.s32 %s33, %s34
        %p272 = scmp.lt.s32.totalorder %s271, 1
        %s273 = scalar_select %p272, %s271, 1
        %s274 = sadd.s32 %s33, %s34
        %s275 = smul.u32 %s274, 1024
        %p276 = scmp.eq.s32.totalorder %s34, 0
        // Predicated region
        $region37: #{tpu_custom_call.1} parent=27 // pred_check
          %p277 = pneg %p276
        $region38: #{tpu_custom_call.1} parent=27 // pred_check_branch
          %279 = sbr.rel (%p277) target = $region40
        $region39: #{tpu_custom_call.1} parent=27 // pred_region
          %280 = vst [vmem:[#allocation2] sm:$0x1] 0.0
          %281 = vst [vmem:[#allocation3] sm:$0x1] 0.0
        $region40: #{tpu_custom_call.1} parent=27 // pred_fallthru
          _
        %s282 = sld [smem:[#allocation5]]
        %s283 = sadd.s32 %s275, 1024
        %p284 = scmp.gt.s32.totalorder %s283, %s282
        %p285 = scmp.le.s32.totalorder %s283, %s282
        // Predicated region
        $region41: #{tpu_custom_call.1} parent=27 // pred_check
          %p286 = pneg %p285
        $region42: #{tpu_custom_call.1} parent=27 // pred_check_branch
          %288 = sbr.rel (%p286) target = $region44
        $region43: #{tpu_custom_call.1} parent=27 // pred_region
          %v289 = vld [vmem:[%s226] sm:$0xff]
          %v290 = vld [vmem:[%s236] sm:$0xff]
          %vm291 = vcmp.eq.f32.partialorder %v290, 1.0
          %v292 = vsub.f32 1.0, %v289
          %v293 = vsub.f32 1.0, %v290
          %v294 = vsel %vm291, %v289, %v292
          %v295 = vlog2.pop %v294
          %v296 = vmul.f32 %v295, 0.6931472
          %v297 = vmul.f32 %v293, %v293
          %v298 = vmul.f32 %v289, %v289
          %v299 = vmul.f32 %v297, %v297
          %v300 = vmul.f32 %v298, %v299
          %v301 = vmul.f32 %v292, %v292
          %vm302 = vcmp.lt.f32.partialorder %v290, 1.0
          %v303 = vsel %vm302, %v300, 0.0
          %v304 = vsel %vm291, %v301, %v303
          %v305 = vld [vmem:[#allocation2] sm:$0x1]
          %v306 = vmul.f32 %v296, %v304
          %v307 = vrot.slane %v306, 4
          %v308 = vadd.f32 %v306, %v307
          %v309 = vrot.slane %v308, 2
          %v310 = vadd.f32 %v308, %v309
          %v311 = vrot.slane %v310, 1
          %v312 = vadd.f32 %v310, %v311
          %v313 = vadd.f32 %v305, %v312
          %314 = vst [vmem:[#allocation2] sm:$0x1] %v313
          %v315 = vld [vmem:[#allocation3] sm:$0x1]
          %v316 = vsel %vm291, 1, 0
          %v317 = vcvt.s32.f32 %v316
          %v318 = vrot.slane %v317, 4
          %v319 = vadd.f32 %v317, %v318
          %v320 = vrot.slane %v319, 2
          %v321 = vadd.f32 %v319, %v320
          %v322 = vrot.slane %v321, 1
          %v323 = vadd.f32 %v321, %v322
          %v324 = vadd.f32 %v315, %v323
          %325 = vst [vmem:[#allocation3] sm:$0x1] %v324
        $region44: #{tpu_custom_call.1} parent=27 // pred_fallthru
          _
        // Predicated region
        $region45: #{tpu_custom_call.1} parent=27 // pred_check
          %p326 = pneg %p284
        $region46: #{tpu_custom_call.1} parent=27 // pred_check_branch
          %328 = sbr.rel (%p326) target = $region48
        $region47: #{tpu_custom_call.1} parent=27 // pred_region
          %v329 = vlaneseq
          %v330 = vshrl.u32 %v329, 7
          %v331 = vlaneseq
          %v332 = vand.u32 %v331, 127
          %v333 = vmul.u32 %v330, 128
          %v334 = vstv %s275
          %v335 = vadd.s32 %v334, %v333
          %v336 = vadd.s32 %v335, %v332
          %v337 = vstv %s282
          %vm338 = vcmp.lt.s32.totalorder %v336, %v337
          %v339 = vld [vmem:[%s226] sm:$0xff]
          %v340 = vsel %vm338, %v339, 0.5
          %v341 = vld [vmem:[%s236] sm:$0xff]
          %v342 = vsel %vm338, %v341, 2.0
          %vm343 = vcmp.eq.f32.partialorder %v342, 1.0
          %v344 = vsub.f32 1.0, %v340
          %v345 = vsub.f32 1.0, %v342
          %v346 = vsel %vm343, %v340, %v344
          %v347 = vlog2.pop %v346
          %v348 = vmul.f32 %v347, 0.6931472
          %v349 = vmul.f32 %v345, %v345
          %v350 = vmul.f32 %v340, %v340
          %v351 = vmul.f32 %v349, %v349
          %v352 = vmul.f32 %v350, %v351
          %v353 = vmul.f32 %v344, %v344
          %vm354 = vcmp.lt.f32.partialorder %v342, 1.0
          %v355 = vsel %vm354, %v352, 0.0
          %v356 = vsel %vm343, %v353, %v355
          %v357 = vld [vmem:[#allocation2] sm:$0x1]
          %v358 = vmul.f32 %v348, %v356
          %v359 = vrot.slane %v358, 4
          %v360 = vadd.f32 %v358, %v359
          %v361 = vrot.slane %v360, 2
          %v362 = vadd.f32 %v360, %v361
          %v363 = vrot.slane %v362, 1
          %v364 = vadd.f32 %v362, %v363
          %v365 = vadd.f32 %v357, %v364
          %366 = vst [vmem:[#allocation2] sm:$0x1] %v365
          %v367 = vld [vmem:[#allocation3] sm:$0x1]
          %v368 = vsel %vm343, 1, 0
          %v369 = vcvt.s32.f32 %v368
          %v370 = vrot.slane %v369, 4
          %v371 = vadd.f32 %v369, %v370
          %v372 = vrot.slane %v371, 2
          %v373 = vadd.f32 %v371, %v372
          %v374 = vrot.slane %v373, 1
          %v375 = vadd.f32 %v373, %v374
          %v376 = vadd.f32 %v367, %v375
          %377 = vst [vmem:[#allocation3] sm:$0x1] %v376
        $region48: #{tpu_custom_call.1} parent=27 // pred_fallthru
          _
        // Predicated region
        $region49: #{tpu_custom_call.1} parent=27 // pred_check
          %p378 = pneg %p276
        $region50: #{tpu_custom_call.1} parent=27 // pred_check_branch
          %380 = sbr.rel (%p378) target = $region52
        $region51: #{tpu_custom_call.1} parent=27 // pred_region
          %v381 = vld [vmem:[#allocation2] sm:$0x1]
          %382 = vst [vmem:[%s261] sm:$0x1] %v381
          %v383 = vld [vmem:[#allocation3] sm:$0x1]
          %384 = vst [vmem:[%s267] sm:$0x1] %v383
        $region52: #{tpu_custom_call.1} parent=27 // pred_fallthru
          _
        %s385 = sand.u32 %s113, 1
        %s386 = scalar_lea.sflag [#allocation8], %s385
        %s387 = sand.u32 %s113, 1
        %s388 = scalar_lea.vmem [#allocation11], %s387
        %s389 = sand.u32 %s139, 1
        %s390 = scalar_lea.sflag [#allocation13], %s389
        %s391 = sand.u32 %s139, 1
        %s392 = scalar_lea.vmem [#allocation12], %s391
        // Predicated region
        $region53: #{tpu_custom_call.1} parent=27 // pred_check
          %p393 = pneg %p123
        $region54: #{tpu_custom_call.1} parent=27 // pred_check_branch
          %395 = sbr.rel (%p393) target = $region56
        $region55: #{tpu_custom_call.1} parent=27 // pred_region
          %397 = vsyncadd %s386, 0
          %s398 = scalar_lea.hbm %s3, %s33
          %s400 = sshll.u32 %s388, 4
          %s401 = int_to_ptr.vmem [resolvable:$true] %s400
          %s402 = sshll.u32 %s398, 4
          %s403 = int_to_ptr.hbm [resolvable:$true] %s402
          %405 = dma.vmem_to_hbm [thread:$0]  %s401, 16, %s403, %s386
        $region56: #{tpu_custom_call.1} parent=27 // pred_fallthru
          _
        // Predicated region
        $region57: #{tpu_custom_call.1} parent=27 // pred_check
          %p406 = pneg %p149
        $region58: #{tpu_custom_call.1} parent=27 // pred_check_branch
          %408 = sbr.rel (%p406) target = $region60
        $region59: #{tpu_custom_call.1} parent=27 // pred_region
          %410 = vsyncadd %s390, 0
          %s411 = scalar_lea.hbm %s4, %s33
          %s413 = sshll.u32 %s392, 4
          %s414 = int_to_ptr.vmem [resolvable:$true] %s413
          %s415 = sshll.u32 %s411, 4
          %s416 = int_to_ptr.hbm [resolvable:$true] %s415
          %418 = dma.vmem_to_hbm [thread:$0]  %s414, 16, %s416, %s390
        $region60: #{tpu_custom_call.1} parent=27 // pred_fallthru
          _
      $region28: #{tpu_custom_call.1} parent=5 // pred_fallthru
        _
      %p419 = scmp.le.s32.totalorder 2, %s24
      // Predicated region
      $region61: #{tpu_custom_call.1} parent=5 // pred_check
        %p420 = pneg %p419
      $region62: #{tpu_custom_call.1} parent=5 // pred_check_branch
        %422 = sbr.rel (%p420) target = $region64
      $region63: #{tpu_custom_call.1} parent=5 // pred_region
        %s423 = ssub.s32 %s24, 2
        // Predicated region
        $region65: #{tpu_custom_call.1} parent=63 // pred_check
          %p424 = pneg %p129
        $region66: #{tpu_custom_call.1} parent=63 // pred_check_branch
          %426 = sbr.rel (%p424) target = $region68
        $region67: #{tpu_custom_call.1} parent=63 // pred_region
          %s427 = sand.u32 %s114, 1
          %s428 = scalar_lea.sflag [#allocation8], %s427
          %s429 = sand.u32 %s114, 1
          %s430 = scalar_lea.vmem [#allocation11], %s429
          %432 = dma.done %s428, 16
        $region68: #{tpu_custom_call.1} parent=63 // pred_fallthru
          _
        // Predicated region
        $region69: #{tpu_custom_call.1} parent=63 // pred_check
          %p433 = pneg %p155
        $region70: #{tpu_custom_call.1} parent=63 // pred_check_branch
          %435 = sbr.rel (%p433) target = $region72
        $region71: #{tpu_custom_call.1} parent=63 // pred_region
          %s436 = sand.u32 %s140, 1
          %s437 = scalar_lea.sflag [#allocation13], %s436
          %s438 = sand.u32 %s140, 1
          %s439 = scalar_lea.vmem [#allocation12], %s438
          %441 = dma.done %s437, 16
        $region72: #{tpu_custom_call.1} parent=63 // pred_fallthru
          _
      $region64: #{tpu_custom_call.1} parent=5 // pred_fallthru
        _
    $region6: #{tpu_custom_call.1} parent=1 // loop_footer
      %s28 = sadd.s32 1, %s24
    $region7: #{tpu_custom_call.1} parent=1 // loop_footer_branch
      %23 = sbr.rel target = $region3
    $region8: #{tpu_custom_call.1} parent=1 // loop_exit
      _
    %442 = vsyncpa [#allocation7], 1
    %s443 = scalar_lea.sflag [#allocation7], 1
    %444 = vsyncpa %s443, 1
    %445 = vsyncpa [#allocation10], 1
    %s446 = scalar_lea.sflag [#allocation10], 1
    %447 = vsyncpa %s446, 1
    %448 = vsyncpa [#allocation8], 1
    %s449 = scalar_lea.sflag [#allocation8], 1
    %450 = vsyncpa %s449, 1
    %451 = vsyncpa [#allocation13], 1
    %s452 = scalar_lea.sflag [#allocation13], 1
    %453 = vsyncpa %s452, 1

</llo_original>
